<compile_context>
chip_gen: v5e
topology: v5e:2x2
jax: 0.10.0
libtpu: 0.0.40
codegen_flags: <defaults>
</compile_context>

<pallas_src>
import functools

import jax
import jax.numpy as jnp
import numpy as np
from jax.experimental import pallas as pl
from jax.experimental.pallas import tpu as pltpu

NEG_SLOPE = 0.01   # torch.nn.LeakyReLU default
LANE = 128
SUBLANE = 8
MAX_TILE_S = 512   # sets per grid step (multiple of 256 -> full MXU tiles)


def _leaky_relu(x):
    # mul + max (one fewer VPU op than cmp+select+mul); valid for slope < 1.
    return jnp.maximum(x, NEG_SLOPE * x)


def _round_up(a, m):
    return ((a + m - 1) // m) * m


# ---------------------------------------------------------------------------
# Kernel: one tile of TILE_S sets per grid step.
#   x_ref     : [E, TILE_S, CIN_PAD] f32   element-major input rows
#   wphi0_ref : [CIN_PAD, 128]       f32   phi layer-0 weight (transposed, padded)
#   wphi_ref  : [max(Lphi-1,1),128,128] bf16  phi layers 1.. (transposed, padded)
#   bphi_ref  : [Lphi, 1, 128]       f32   phi biases
#   wrho_ref  : [Lrho, 128, 128]     bf16  rho weights
#   brho_ref  : [Lrho, 1, 128]       f32   rho biases
#   out_ref   : [TILE_S, 128]        f32   lane-dense output tile
# ---------------------------------------------------------------------------
def deepset_kernel(E, n_phi, n_rho,
                   x_ref, wphi0_ref, wphi_ref, bphi_ref, wrho_ref, brho_ref,
                   out_ref):
    # Hoist weight/bias loads out of the unrolled element loop.
    w0 = wphi0_ref[...]
    b_phi = [bphi_ref[l] for l in range(n_phi)]
    w_phi = [wphi_ref[l] for l in range(n_phi - 1)]
    w_rho = [wrho_ref[l] for l in range(n_rho)]
    b_rho = [brho_ref[l] for l in range(n_rho)]

    # phi MLP per element, accumulating the DeepSet sum in f32 (VPU adds).
    z = None
    for e in range(E):
        # Layer 0: tiny-K f32 matmul lifts [TILE_S, CIN_PAD] -> 128 lanes.
        h = jnp.dot(x_ref[e], w0, preferred_element_type=jnp.float32) + b_phi[0]
        if n_phi > 1:
            h = _leaky_relu(h)
        # Hidden / last phi layers: bf16 MXU inputs, f32 accumulation.
        for l in range(1, n_phi):
            h = jnp.dot(h.astype(jnp.bfloat16), w_phi[l - 1],
                        preferred_element_type=jnp.float32) + b_phi[l]
            if l < n_phi - 1:
                h = _leaky_relu(h)
        z = h if z is None else z + h

    # rho MLP on the pooled representation.
    for l in range(n_rho):
        z = jnp.dot(z.astype(jnp.bfloat16), w_rho[l],
                    preferred_element_type=jnp.float32) + b_rho[l]
        if l < n_rho - 1:
            z = _leaky_relu(z)

    out_ref[...] = z


# ---------------------------------------------------------------------------
# Wrapper glue: layout / packing / pallas_call.
# ---------------------------------------------------------------------------
def _pack_first_weight(W, cin_pad):
    """torch Linear stores W as [out, in]; transpose, pad to [cin_pad, 128] f32."""
    o, i = W.shape
    assert i <= LANE and o <= LANE, "channel dims > 128 need lane tiling"
    wp = np.zeros((cin_pad, LANE), np.float32)
    wp[:i, :o] = np.asarray(W, np.float32).T
    return jnp.asarray(wp)


def _pack_weight_stack(Ws):
    """Transpose, zero-pad to 128x128, stack, cast to bf16 (MXU-native)."""
    L = max(len(Ws), 1)
    wp = np.zeros((L, LANE, LANE), np.float32)
    for l, W in enumerate(Ws):
        o, i = W.shape
        assert i <= LANE and o <= LANE, "channel dims > 128 need lane tiling"
        wp[l, :i, :o] = np.asarray(W, np.float32).T
    return jnp.asarray(wp).astype(jnp.bfloat16)


def _pack_bias_stack(bs):
    L = len(bs)
    bp = np.zeros((L, 1, LANE), np.float32)
    for l, b in enumerate(bs):
        o = np.asarray(b).shape[0]
        assert o <= LANE
        bp[l, 0, :o] = np.asarray(b, np.float32)
    return jnp.asarray(bp)


def deepset_forward(x, phi_Ws, phi_bs, rho_Ws, rho_bs, in_channels_phi):
    B, N, F = x.shape
    c_phi = in_channels_phi
    E = F // c_phi                        # num_elements (floor div, as in torch)
    c_out = rho_Ws[-1].shape[0]
    Lphi, Lrho = len(phi_Ws), len(rho_Ws)
    Lphi_rest = max(Lphi - 1, 1)

    assert c_phi <= LANE
    cin_pad = _round_up(c_phi, SUBLANE)

    # Tile over the flattened (batch, node) set dimension.
    S = B * N
    S8 = _round_up(S, SUBLANE)
    tile_s = S8 if S8 <= MAX_TILE_S else MAX_TILE_S
    S_pad = _round_up(S, tile_s)
    grid = S_pad // tile_s

    # Element-major input slab [E, S_pad, cin_pad] (zero row / channel padding).
    xr = (x[:, :, :E * c_phi]
          .reshape(S, E, c_phi)
          .transpose(1, 0, 2)
          .astype(jnp.float32))
    xe = jnp.zeros((E, S_pad, cin_pad), jnp.float32).at[:, :S, :c_phi].set(xr)

    wphi0 = _pack_first_weight(phi_Ws[0], cin_pad)          # f32 (tiny K layer)
    wphi = _pack_weight_stack(phi_Ws[1:])                    # bf16
    bphi = _pack_bias_stack(phi_bs)                          # f32
    wrho = _pack_weight_stack(rho_Ws)                        # bf16
    brho = _pack_bias_stack(rho_bs)                          # f32

    flops = 2 * S_pad * (E * (cin_pad * LANE + (Lphi - 1) * LANE * LANE)
                         + Lrho * LANE * LANE)
    bytes_accessed = (4 * E * S_pad * cin_pad                 # input slab
                      + 4 * cin_pad * LANE                    # wphi0 (f32)
                      + 2 * (Lphi_rest + Lrho) * LANE * LANE  # bf16 weights
                      + 4 * (Lphi + Lrho) * LANE              # biases
                      + 4 * S_pad * LANE)                     # output

    kernel = functools.partial(deepset_kernel, E, Lphi, Lrho)
    y = pl.pallas_call(
        kernel,
        out_shape=jax.ShapeDtypeStruct((S_pad, LANE), jnp.float32),
        grid=(grid,),
        in_specs=[
            pl.BlockSpec((E, tile_s, cin_pad), lambda i: (0, i, 0)),    # xe
            pl.BlockSpec((cin_pad, LANE), lambda i: (0, 0)),            # wphi0
            pl.BlockSpec((Lphi_rest, LANE, LANE), lambda i: (0, 0, 0)), # wphi
            pl.BlockSpec((Lphi, 1, LANE), lambda i: (0, 0, 0)),         # bphi
            pl.BlockSpec((Lrho, LANE, LANE), lambda i: (0, 0, 0)),      # wrho
            pl.BlockSpec((Lrho, 1, LANE), lambda i: (0, 0, 0)),         # brho
        ],
        out_specs=pl.BlockSpec((tile_s, LANE), lambda i: (i, 0)),
        compiler_params=pltpu.CompilerParams(
            dimension_semantics=("parallel",),
            # Working set (~2 MiB at tile_s=512) fits easily; 32 MiB is safe on
            # v5e/v6e (128 MiB VMEM) and v7x (64 MiB VMEM).
            vmem_limit_bytes=32 * 1024 * 1024),
        cost_estimate=pl.CostEstimate(flops=flops, transcendentals=0,
                                      bytes_accessed=bytes_accessed),
    )(xe, wphi0, wphi, bphi, wrho, brho)

    return y[:S, :c_out].reshape(B, N, c_out)


# ---------------------------------------------------------------------------
# References.
#   * _mirror_*: same numerics as the kernel (bf16 MXU inputs, f32 accum) —
#     primary correctness check with tight tolerance.
#   * _f32_*: pure f32 module semantics — looser sanity check for the
#     bf16 weight/activation rounding.
# ---------------------------------------------------------------------------
def _mirror_mlp(h, Ws, bs, first_layer_f32):
    L = len(Ws)
    for l in range(L):
        Wt = jnp.asarray(Ws[l], jnp.float32).T
        b = jnp.asarray(bs[l], jnp.float32)
        if l == 0 and first_layer_f32:
            h = jnp.dot(h, Wt, preferred_element_type=jnp.float32) + b
        else:
            h = jnp.dot(h.astype(jnp.bfloat16), Wt.astype(jnp.bfloat16),
                        preferred_element_type=jnp.float32) + b
        if l < L - 1:
            h = _leaky_relu(h)
    return h


def mirror_forward(x, phi_Ws, phi_bs, rho_Ws, rho_bs, c_phi):
    B, N, F = x.shape
    E = F // c_phi
    R = phi_Ws[-1].shape[0]
    X = jnp.zeros((B, N, R), jnp.float32)
    for i in range(E):
        X = X + _mirror_mlp(x[:, :, i * c_phi:(i + 1) * c_phi].astype(jnp.float32),
                            phi_Ws, phi_bs, first_layer_f32=True)
    return _mirror_mlp(X, rho_Ws, rho_bs, first_layer_f32=False)


def _f32_mlp(h, Ws, bs):
    L = len(Ws)
    for l in range(L):
        h = h @ jnp.asarray(Ws[l], jnp.float32).T + jnp.asarray(bs[l], jnp.float32)
        if l < L - 1:
            h = _leaky_relu(h)
    return h


def f32_forward(x, phi_Ws, phi_bs, rho_Ws, rho_bs, c_phi):
    B, N, F = x.shape
    E = F // c_phi
    R = phi_Ws[-1].shape[0]
    X = jnp.zeros((B, N, R), jnp.float32)
    for i in range(E):
        X = X + _f32_mlp(x[:, :, i * c_phi:(i + 1) * c_phi].astype(jnp.float32),
                         phi_Ws, phi_bs)
    return _f32_mlp(X, rho_Ws, rho_bs)


if __name__ == "__main__":
    key = jax.random.PRNGKey(0)

    # Small shapes consistent with the module.
    B, N = 2, 8
    in_channels_phi = 4
    in_channels_rho = 16
    out_channels = 3
    n_hidden_channels = 32
    n_layers = 2
    num_elements = 4
    F = num_elements * in_channels_phi          # x feature dim

    k_x, k_phi, k_rho = jax.random.split(key, 3)
    x = jax.random.normal(k_x, (B, N, F), jnp.float32)

    def make_mlp(k, cin, hidden, cout, L):
        dims = [cin] + [hidden] * (L - 1) + [cout]
        Ws, bs = [], []
        for l in range(L):
            k, kw, kb = jax.random.split(k, 3)
            Ws.append(0.3 * jax.random.normal(kw, (dims[l + 1], dims[l]), jnp.float32))
            bs.append(0.1 * jax.random.normal(kb, (dims[l + 1],), jnp.float32))
        return Ws, bs

    phi_Ws, phi_bs = make_mlp(k_phi, in_channels_phi, n_hidden_channels,
                              in_channels_rho, n_layers)
    rho_Ws, rho_bs = make_mlp(k_rho, in_channels_rho, n_hidden_channels,
                              out_channels, n_layers)

    y = deepset_forward(x, phi_Ws, phi_bs, rho_Ws, rho_bs, in_channels_phi)
    y = jax.block_until_ready(y)
    assert y.shape == (B, N, out_channels)

    # Kernel-numerics-matched reference (bf16 MXU inputs, f32 accumulation).
    y_mirror = mirror_forward(x, phi_Ws, phi_bs, rho_Ws, rho_bs, in_channels_phi)
    np.testing.assert_allclose(np.asarray(y), np.asarray(y_mirror),
                               rtol=1e-3, atol=1e-3)

    # Pure f32 module semantics (loose tolerance for bf16 weight rounding).
    y_f32 = f32_forward(x, phi_Ws, phi_bs, rho_Ws, rho_bs, in_channels_phi)
    np.testing.assert_allclose(np.asarray(y), np.asarray(y_f32),
                               rtol=5e-2, atol=5e-2)

    print("KERNEL_OK")
</pallas_src>

<mosaic_0001>
module attributes {stable_mosaic.version = 11 : i64} {
  func.func @deepset_kernel(%arg0: i32, %arg1: memref<4x16x8xf32, #tpu.memory_space<vmem>>, %arg2: memref<8x128xf32, #tpu.memory_space<vmem>>, %arg3: memref<1x128x128xbf16, #tpu.memory_space<vmem>>, %arg4: memref<2x1x128xf32, #tpu.memory_space<vmem>>, %arg5: memref<2x128x128xbf16, #tpu.memory_space<vmem>>, %arg6: memref<2x1x128xf32, #tpu.memory_space<vmem>>, %arg7: memref<16x128xf32, #tpu.memory_space<vmem>>) attributes {dimension_semantics = [#tpu.dimension_semantics<parallel>], iteration_bounds = array<i64: 1>, scalar_prefetch = 0 : i64, scratch_operands = 0 : i64, tpu.core_type = #tpu.core_type<tc>, window_params = [{transform_indices = @transform_0, window_bounds = array<i64: 4, 16, 8>}, {pipeline_mode = #tpu.pipeline_mode<synchronous>, transform_indices = @transform_1, window_bounds = array<i64: 8, 128>}, {pipeline_mode = #tpu.pipeline_mode<synchronous>, transform_indices = @transform_2, window_bounds = array<i64: 1, 128, 128>}, {pipeline_mode = #tpu.pipeline_mode<synchronous>, transform_indices = @transform_3, window_bounds = array<i64: 2, 1, 128>}, {pipeline_mode = #tpu.pipeline_mode<synchronous>, transform_indices = @transform_4, window_bounds = array<i64: 2, 128, 128>}, {pipeline_mode = #tpu.pipeline_mode<synchronous>, transform_indices = @transform_5, window_bounds = array<i64: 2, 1, 128>}, {transform_indices = @transform_6, window_bounds = array<i64: 16, 128>}]} {
    %c0 = arith.constant 0 : index
    %c0_0 = arith.constant 0 : index
    %0 = vector.load %arg2[%c0, %c0_0] : memref<8x128xf32, #tpu.memory_space<vmem>>, vector<8x128xf32>
    %c0_1 = arith.constant 0 : index
    %c0_2 = arith.constant 0 : index
    %c0_3 = arith.constant 0 : index
    %1 = vector.load %arg4[%c0_1, %c0_2, %c0_3] : memref<2x1x128xf32, #tpu.memory_space<vmem>>, vector<1x1x128xf32>
    %2 = vector.shape_cast %1 : vector<1x1x128xf32> to vector<1x128xf32>
    %c1 = arith.constant 1 : index
    %c0_4 = arith.constant 0 : index
    %c0_5 = arith.constant 0 : index
    %3 = vector.load %arg4[%c1, %c0_4, %c0_5] : memref<2x1x128xf32, #tpu.memory_space<vmem>>, vector<1x1x128xf32>
    %4 = vector.shape_cast %3 : vector<1x1x128xf32> to vector<1x128xf32>
    %c0_6 = arith.constant 0 : index
    %c0_7 = arith.constant 0 : index
    %c0_8 = arith.constant 0 : index
    %5 = vector.load %arg3[%c0_6, %c0_7, %c0_8] : memref<1x128x128xbf16, #tpu.memory_space<vmem>>, vector<1x128x128xbf16>
    %6 = vector.shape_cast %5 : vector<1x128x128xbf16> to vector<128x128xbf16>
    %c0_9 = arith.constant 0 : index
    %c0_10 = arith.constant 0 : index
    %c0_11 = arith.constant 0 : index
    %7 = vector.load %arg5[%c0_9, %c0_10, %c0_11] : memref<2x128x128xbf16, #tpu.memory_space<vmem>>, vector<1x128x128xbf16>
    %8 = vector.shape_cast %7 : vector<1x128x128xbf16> to vector<128x128xbf16>
    %c1_12 = arith.constant 1 : index
    %c0_13 = arith.constant 0 : index
    %c0_14 = arith.constant 0 : index
    %9 = vector.load %arg5[%c1_12, %c0_13, %c0_14] : memref<2x128x128xbf16, #tpu.memory_space<vmem>>, vector<1x128x128xbf16>
    %10 = vector.shape_cast %9 : vector<1x128x128xbf16> to vector<128x128xbf16>
    %c0_15 = arith.constant 0 : index
    %c0_16 = arith.constant 0 : index
    %c0_17 = arith.constant 0 : index
    %11 = vector.load %arg6[%c0_15, %c0_16, %c0_17] : memref<2x1x128xf32, #tpu.memory_space<vmem>>, vector<1x1x128xf32>
    %12 = vector.shape_cast %11 : vector<1x1x128xf32> to vector<1x128xf32>
    %c1_18 = arith.constant 1 : index
    %c0_19 = arith.constant 0 : index
    %c0_20 = arith.constant 0 : index
    %13 = vector.load %arg6[%c1_18, %c0_19, %c0_20] : memref<2x1x128xf32, #tpu.memory_space<vmem>>, vector<1x1x128xf32>
    %14 = vector.shape_cast %13 : vector<1x1x128xf32> to vector<1x128xf32>
    %c0_21 = arith.constant 0 : index
    %c0_22 = arith.constant 0 : index
    %c0_23 = arith.constant 0 : index
    %15 = vector.load %arg1[%c0_21, %c0_22, %c0_23] : memref<4x16x8xf32, #tpu.memory_space<vmem>>, vector<1x16x8xf32>
    %16 = vector.shape_cast %15 : vector<1x16x8xf32> to vector<16x8xf32>
    %cst = arith.constant dense<0.000000e+00> : vector<16x128xf32>
    %17 = tpu.matmul %16, %0, %cst {dimension_numbers = #tpu.dot_dimension_numbers<[1], [0], [0], [1], [0, 0, 1, 1], [], []>} : vector<16x8xf32>, vector<8x128xf32>, vector<16x128xf32> -> vector<16x128xf32>
    %18 = vector.broadcast %2 : vector<1x128xf32> to vector<16x128xf32>
    %19 = arith.addf %17, %18 : vector<16x128xf32>
    %cst_24 = arith.constant 0.00999999977 : f32
    %20 = vector.broadcast %cst_24 : f32 to vector<16x128xf32>
    %21 = arith.mulf %20, %19 : vector<16x128xf32>
    %22 = arith.maximumf %19, %21 : vector<16x128xf32>
    %23 = arith.truncf %22 : vector<16x128xf32> to vector<16x128xbf16>
    %cst_25 = arith.constant dense<0.000000e+00> : vector<16x128xf32>
    %24 = tpu.matmul %23, %6, %cst_25 {dimension_numbers = #tpu.dot_dimension_numbers<[1], [0], [0], [1], [0, 0, 1, 1], [], []>} : vector<16x128xbf16>, vector<128x128xbf16>, vector<16x128xf32> -> vector<16x128xf32>
    %25 = vector.broadcast %4 : vector<1x128xf32> to vector<16x128xf32>
    %26 = arith.addf %24, %25 : vector<16x128xf32>
    %c1_26 = arith.constant 1 : index
    %c0_27 = arith.constant 0 : index
    %c0_28 = arith.constant 0 : index
    %27 = vector.load %arg1[%c1_26, %c0_27, %c0_28] : memref<4x16x8xf32, #tpu.memory_space<vmem>>, vector<1x16x8xf32>
    %28 = vector.shape_cast %27 : vector<1x16x8xf32> to vector<16x8xf32>
    %cst_29 = arith.constant dense<0.000000e+00> : vector<16x128xf32>
    %29 = tpu.matmul %28, %0, %cst_29 {dimension_numbers = #tpu.dot_dimension_numbers<[1], [0], [0], [1], [0, 0, 1, 1], [], []>} : vector<16x8xf32>, vector<8x128xf32>, vector<16x128xf32> -> vector<16x128xf32>
    %30 = vector.broadcast %2 : vector<1x128xf32> to vector<16x128xf32>
    %31 = arith.addf %29, %30 : vector<16x128xf32>
    %cst_30 = arith.constant 0.00999999977 : f32
    %32 = vector.broadcast %cst_30 : f32 to vector<16x128xf32>
    %33 = arith.mulf %32, %31 : vector<16x128xf32>
    %34 = arith.maximumf %31, %33 : vector<16x128xf32>
    %35 = arith.truncf %34 : vector<16x128xf32> to vector<16x128xbf16>
    %cst_31 = arith.constant dense<0.000000e+00> : vector<16x128xf32>
    %36 = tpu.matmul %35, %6, %cst_31 {dimension_numbers = #tpu.dot_dimension_numbers<[1], [0], [0], [1], [0, 0, 1, 1], [], []>} : vector<16x128xbf16>, vector<128x128xbf16>, vector<16x128xf32> -> vector<16x128xf32>
    %37 = vector.broadcast %4 : vector<1x128xf32> to vector<16x128xf32>
    %38 = arith.addf %36, %37 : vector<16x128xf32>
    %39 = arith.addf %26, %38 : vector<16x128xf32>
    %c2 = arith.constant 2 : index
    %c0_32 = arith.constant 0 : index
    %c0_33 = arith.constant 0 : index
    %40 = vector.load %arg1[%c2, %c0_32, %c0_33] : memref<4x16x8xf32, #tpu.memory_space<vmem>>, vector<1x16x8xf32>
    %41 = vector.shape_cast %40 : vector<1x16x8xf32> to vector<16x8xf32>
    %cst_34 = arith.constant dense<0.000000e+00> : vector<16x128xf32>
    %42 = tpu.matmul %41, %0, %cst_34 {dimension_numbers = #tpu.dot_dimension_numbers<[1], [0], [0], [1], [0, 0, 1, 1], [], []>} : vector<16x8xf32>, vector<8x128xf32>, vector<16x128xf32> -> vector<16x128xf32>
    %43 = vector.broadcast %2 : vector<1x128xf32> to vector<16x128xf32>
    %44 = arith.addf %42, %43 : vector<16x128xf32>
    %cst_35 = arith.constant 0.00999999977 : f32
    %45 = vector.broadcast %cst_35 : f32 to vector<16x128xf32>
    %46 = arith.mulf %45, %44 : vector<16x128xf32>
    %47 = arith.maximumf %44, %46 : vector<16x128xf32>
    %48 = arith.truncf %47 : vector<16x128xf32> to vector<16x128xbf16>
    %cst_36 = arith.constant dense<0.000000e+00> : vector<16x128xf32>
    %49 = tpu.matmul %48, %6, %cst_36 {dimension_numbers = #tpu.dot_dimension_numbers<[1], [0], [0], [1], [0, 0, 1, 1], [], []>} : vector<16x128xbf16>, vector<128x128xbf16>, vector<16x128xf32> -> vector<16x128xf32>
    %50 = vector.broadcast %4 : vector<1x128xf32> to vector<16x128xf32>
    %51 = arith.addf %49, %50 : vector<16x128xf32>
    %52 = arith.addf %39, %51 : vector<16x128xf32>
    %c3 = arith.constant 3 : index
    %c0_37 = arith.constant 0 : index
    %c0_38 = arith.constant 0 : index
    %53 = vector.load %arg1[%c3, %c0_37, %c0_38] : memref<4x16x8xf32, #tpu.memory_space<vmem>>, vector<1x16x8xf32>
    %54 = vector.shape_cast %53 : vector<1x16x8xf32> to vector<16x8xf32>
    %cst_39 = arith.constant dense<0.000000e+00> : vector<16x128xf32>
    %55 = tpu.matmul %54, %0, %cst_39 {dimension_numbers = #tpu.dot_dimension_numbers<[1], [0], [0], [1], [0, 0, 1, 1], [], []>} : vector<16x8xf32>, vector<8x128xf32>, vector<16x128xf32> -> vector<16x128xf32>
    %56 = vector.broadcast %2 : vector<1x128xf32> to vector<16x128xf32>
    %57 = arith.addf %55, %56 : vector<16x128xf32>
    %cst_40 = arith.constant 0.00999999977 : f32
    %58 = vector.broadcast %cst_40 : f32 to vector<16x128xf32>
    %59 = arith.mulf %58, %57 : vector<16x128xf32>
    %60 = arith.maximumf %57, %59 : vector<16x128xf32>
    %61 = arith.truncf %60 : vector<16x128xf32> to vector<16x128xbf16>
    %cst_41 = arith.constant dense<0.000000e+00> : vector<16x128xf32>
    %62 = tpu.matmul %61, %6, %cst_41 {dimension_numbers = #tpu.dot_dimension_numbers<[1], [0], [0], [1], [0, 0, 1, 1], [], []>} : vector<16x128xbf16>, vector<128x128xbf16>, vector<16x128xf32> -> vector<16x128xf32>
    %63 = vector.broadcast %4 : vector<1x128xf32> to vector<16x128xf32>
    %64 = arith.addf %62, %63 : vector<16x128xf32>
    %65 = arith.addf %52, %64 : vector<16x128xf32>
    %66 = arith.truncf %65 : vector<16x128xf32> to vector<16x128xbf16>
    %cst_42 = arith.constant dense<0.000000e+00> : vector<16x128xf32>
    %67 = tpu.matmul %66, %8, %cst_42 {dimension_numbers = #tpu.dot_dimension_numbers<[1], [0], [0], [1], [0, 0, 1, 1], [], []>} : vector<16x128xbf16>, vector<128x128xbf16>, vector<16x128xf32> -> vector<16x128xf32>
    %68 = vector.broadcast %12 : vector<1x128xf32> to vector<16x128xf32>
    %69 = arith.addf %67, %68 : vector<16x128xf32>
    %cst_43 = arith.constant 0.00999999977 : f32
    %70 = vector.broadcast %cst_43 : f32 to vector<16x128xf32>
    %71 = arith.mulf %70, %69 : vector<16x128xf32>
    %72 = arith.maximumf %69, %71 : vector<16x128xf32>
    %73 = arith.truncf %72 : vector<16x128xf32> to vector<16x128xbf16>
    %cst_44 = arith.constant dense<0.000000e+00> : vector<16x128xf32>
    %74 = tpu.matmul %73, %10, %cst_44 {dimension_numbers = #tpu.dot_dimension_numbers<[1], [0], [0], [1], [0, 0, 1, 1], [], []>} : vector<16x128xbf16>, vector<128x128xbf16>, vector<16x128xf32> -> vector<16x128xf32>
    %75 = vector.broadcast %14 : vector<1x128xf32> to vector<16x128xf32>
    %76 = arith.addf %74, %75 : vector<16x128xf32>
    %c0_45 = arith.constant 0 : index
    %c0_46 = arith.constant 0 : index
    %77 = vector.load %arg7[%c0_45, %c0_46] : memref<16x128xf32, #tpu.memory_space<vmem>>, vector<16x128xf32>
    tpu.vector_store %arg7[%c0_45, %c0_46], %76 {strides = array<i32>} : memref<16x128xf32, #tpu.memory_space<vmem>>, vector<16x128xf32>,
    return
  }
  func.func @transform_0(%arg0: i32) -> (i32, i32, i32) {
    %c0_i32 = arith.constant 0 : i32
    %c0_i32_0 = arith.constant 0 : i32
    %c0_i32_1 = arith.constant 0 : i32
    return %c0_i32, %arg0, %c0_i32_0 : i32, i32, i32
  }
  func.func @transform_1(%arg0: i32) -> (i32, i32) {
    %c0_i32 = arith.constant 0 : i32
    %c0_i32_0 = arith.constant 0 : i32
    %c0_i32_1 = arith.constant 0 : i32
    return %c0_i32, %c0_i32_0 : i32, i32
  }
  func.func @transform_2(%arg0: i32) -> (i32, i32, i32) {
    %c0_i32 = arith.constant 0 : i32
    %c0_i32_0 = arith.constant 0 : i32
    %c0_i32_1 = arith.constant 0 : i32
    %c0_i32_2 = arith.constant 0 : i32
    return %c0_i32, %c0_i32_0, %c0_i32_1 : i32, i32, i32
  }
  func.func @transform_3(%arg0: i32) -> (i32, i32, i32) {
    %c0_i32 = arith.constant 0 : i32
    %c0_i32_0 = arith.constant 0 : i32
    %c0_i32_1 = arith.constant 0 : i32
    %c0_i32_2 = arith.constant 0 : i32
    return %c0_i32, %c0_i32_0, %c0_i32_1 : i32, i32, i32
  }
  func.func @transform_4(%arg0: i32) -> (i32, i32, i32) {
    %c0_i32 = arith.constant 0 : i32
    %c0_i32_0 = arith.constant 0 : i32
    %c0_i32_1 = arith.constant 0 : i32
    %c0_i32_2 = arith.constant 0 : i32
    return %c0_i32, %c0_i32_0, %c0_i32_1 : i32, i32, i32
  }
  func.func @transform_5(%arg0: i32) -> (i32, i32, i32) {
    %c0_i32 = arith.constant 0 : i32
    %c0_i32_0 = arith.constant 0 : i32
    %c0_i32_1 = arith.constant 0 : i32
    %c0_i32_2 = arith.constant 0 : i32
    return %c0_i32, %c0_i32_0, %c0_i32_1 : i32, i32, i32
  }
  func.func @transform_6(%arg0: i32) -> (i32, i32) {
    %c0_i32 = arith.constant 0 : i32
    %c0_i32_0 = arith.constant 0 : i32
    return %arg0, %c0_i32 : i32, i32
  }
}

</mosaic_0001>

<llo_original>
// kernel: tpu_custom_call.1
$region0: #{tpu_custom_call.1}
  #allocation0 [shape = 'u32[]', space=smem, size = 0x4, offset = 0x4, fixed_abs, tag = 'smem constant byte address 0x4 - core index']
  #allocation1 [shape = 'u32[72,128]{1,0:T(1,128)}', space=vmem, size = 0x9000, scoped, tag = 'internal scratch']
  %s0 = inlined_call_operand.vmem [shape: f32[4,16,8], index: 0, kind: input, shape index: {}]
  %s1 = inlined_call_operand.vmem [shape: f32[8,128], index: 1, kind: input, shape index: {}]
  %s2 = inlined_call_operand.vmem [shape: bf16[1,128,128], index: 2, kind: input, shape index: {}]
  %s3 = inlined_call_operand.vmem [shape: f32[2,1,128], index: 3, kind: input, shape index: {}]
  %s4 = inlined_call_operand.hbm [shape: bf16[2,128,128], index: 4, kind: input, shape index: {}]
  %s5 = inlined_call_operand.vmem [shape: f32[2,1,128], index: 5, kind: input, shape index: {}]
  %s6 = inlined_call_operand.hbm [shape: f32[16,128], index: 6, kind: output, shape index: {}]
  %s7 = sld [smem:[#allocation0]]
  $region38: #{tpu_custom_call.1} parent=0
    _
  %s9 = ssub.s32 1, %s7
  %s10 = scalar_select 0, %s9, %s7
  $region1: #{tpu_custom_call.1} parent=0
    #allocation2 [shape = 'u8[65536]{0}', space=vmem, size = 0x10000, scoped, tag = 'input window, operand 4, single buffered']
    #allocation3 [shape = 's32[1]{0}', space=sflag, size = 0x4, scoped, tag = 'scoped memory for tpu_custom_call.1']
    #allocation4 [shape = 's32[1]{0}', space=sflag, size = 0x4, scoped, tag = 'scoped memory for tpu_custom_call.1']
    #allocation5 [shape = 'u8[8192]{0}', space=vmem, size = 0x2000, scoped, tag = 'output window, operand 0, single buffered']
    %11 = vsyncpa [#allocation3], 0
    %12 = vsyncpa [#allocation4], 0
    // Predicated region
    $region2: #{tpu_custom_call.1} parent=1 // pred_check
      _
    $region3: #{tpu_custom_call.1} parent=1 // pred_check_branch
      %14 = sbr.rel (0) target = $region5
    $region4: #{tpu_custom_call.1} parent=1 // pred_region
      _
    $region5: #{tpu_custom_call.1} parent=1 // pred_fallthru
      _
    // Predicated region
    $region6: #{tpu_custom_call.1} parent=1 // pred_check
      _
    $region7: #{tpu_custom_call.1} parent=1 // pred_check_branch
      %16 = sbr.rel (0) target = $region9
    $region8: #{tpu_custom_call.1} parent=1 // pred_region
      _
    $region9: #{tpu_custom_call.1} parent=1 // pred_fallthru
      _
    // Predicated region
    $region10: #{tpu_custom_call.1} parent=1 // pred_check
      _
    $region11: #{tpu_custom_call.1} parent=1 // pred_check_branch
      %18 = sbr.rel (0) target = $region13
    $region12: #{tpu_custom_call.1} parent=1 // pred_region
      _
    $region13: #{tpu_custom_call.1} parent=1 // pred_fallthru
      _
    // Predicated region
    $region14: #{tpu_custom_call.1} parent=1 // pred_check
      _
    $region15: #{tpu_custom_call.1} parent=1 // pred_check_branch
      %20 = sbr.rel (0) target = $region17
    $region16: #{tpu_custom_call.1} parent=1 // pred_region
      _
    $region17: #{tpu_custom_call.1} parent=1 // pred_fallthru
      _
    // Predicated region
    $region18: #{tpu_custom_call.1} parent=1 // pred_check
      _
    $region19: #{tpu_custom_call.1} parent=1 // pred_check_branch
      %22 = sbr.rel (0) target = $region21
    $region20: #{tpu_custom_call.1} parent=1 // pred_region
      %24 = vsyncadd [#allocation3], 0
      %s25 = sshll.u32 %s4, 4
      %s26 = int_to_ptr.hbm [resolvable:$true] %s25
      %s27 = sshll.u32 [#allocation2], 4
      %s28 = int_to_ptr.vmem [resolvable:$true] %s27
      %33 = dma.hbm_to_vmem [thread:$0]  %s26, 2048, %s28, [#allocation3], 64, 64, 4
    $region21: #{tpu_custom_call.1} parent=1 // pred_fallthru
      _
    // Predicated region
    $region22: #{tpu_custom_call.1} parent=1 // pred_check
      _
    $region23: #{tpu_custom_call.1} parent=1 // pred_check_branch
      %35 = sbr.rel (0) target = $region25
    $region24: #{tpu_custom_call.1} parent=1 // pred_region
      _
    $region25: #{tpu_custom_call.1} parent=1 // pred_fallthru
      _
    // Predicated region
    $region26: #{tpu_custom_call.1} parent=1 // pred_check
      _
    $region27: #{tpu_custom_call.1} parent=1 // pred_check_branch
      %37 = sbr.rel (0) target = $region29
    $region28: #{tpu_custom_call.1} parent=1 // pred_region
      %39 = dma.done [#allocation3], 2048
    $region29: #{tpu_custom_call.1} parent=1 // pred_fallthru
      _
    %v40 = vld [vmem:[%s1] sm:$0xff]
    %v41 = vld [vmem:[%s3] sm:$0x1]
    %s42 = scalar_lea.vmem %s3, 1
    %v43 = vld [vmem:[%s42] sm:$0x1]
    %v44 = vld [vmem:[%s2] sm:$0xf]
    %v45 = vld [vmem:[%s2 + $0x4] sm:$0xf]
    %v46 = vld [vmem:[%s2 + $0x8] sm:$0xf]
    %v47 = vld [vmem:[%s2 + $0xc] sm:$0xf]
    %v48 = vld [vmem:[%s2 + $0x10] sm:$0xf]
    %v49 = vld [vmem:[%s2 + $0x14] sm:$0xf]
    %v50 = vld [vmem:[%s2 + $0x18] sm:$0xf]
    %v51 = vld [vmem:[%s2 + $0x1c] sm:$0xf]
    %v52 = vld [vmem:[%s2 + $0x20] sm:$0xf]
    %v53 = vld [vmem:[%s2 + $0x24] sm:$0xf]
    %v54 = vld [vmem:[%s2 + $0x28] sm:$0xf]
    %v55 = vld [vmem:[%s2 + $0x2c] sm:$0xf]
    %v56 = vld [vmem:[%s2 + $0x30] sm:$0xf]
    %v57 = vld [vmem:[%s2 + $0x34] sm:$0xf]
    %v58 = vld [vmem:[%s2 + $0x38] sm:$0xf]
    %v59 = vld [vmem:[%s2 + $0x3c] sm:$0xf]
    %v60 = vld [vmem:[#allocation2] sm:$0xf]
    %v61 = vld [vmem:[#allocation2 + $0x4] sm:$0xf]
    %v62 = vld [vmem:[#allocation2 + $0x8] sm:$0xf]
    %v63 = vld [vmem:[#allocation2 + $0xc] sm:$0xf]
    %v64 = vld [vmem:[#allocation2 + $0x10] sm:$0xf]
    %v65 = vld [vmem:[#allocation2 + $0x14] sm:$0xf]
    %v66 = vld [vmem:[#allocation2 + $0x18] sm:$0xf]
    %v67 = vld [vmem:[#allocation2 + $0x1c] sm:$0xf]
    %v68 = vld [vmem:[#allocation2 + $0x20] sm:$0xf]
    %v69 = vld [vmem:[#allocation2 + $0x24] sm:$0xf]
    %v70 = vld [vmem:[#allocation2 + $0x28] sm:$0xf]
    %v71 = vld [vmem:[#allocation2 + $0x2c] sm:$0xf]
    %v72 = vld [vmem:[#allocation2 + $0x30] sm:$0xf]
    %v73 = vld [vmem:[#allocation2 + $0x34] sm:$0xf]
    %v74 = vld [vmem:[#allocation2 + $0x38] sm:$0xf]
    %v75 = vld [vmem:[#allocation2 + $0x3c] sm:$0xf]
    %s76 = scalar_lea.vmem [#allocation2], 64
    %v77 = vld [vmem:[%s76] sm:$0xf]
    %v78 = vld [vmem:[%s76 + $0x4] sm:$0xf]
    %v79 = vld [vmem:[%s76 + $0x8] sm:$0xf]
    %v80 = vld [vmem:[%s76 + $0xc] sm:$0xf]
    %v81 = vld [vmem:[%s76 + $0x10] sm:$0xf]
    %v82 = vld [vmem:[%s76 + $0x14] sm:$0xf]
    %v83 = vld [vmem:[%s76 + $0x18] sm:$0xf]
    %v84 = vld [vmem:[%s76 + $0x1c] sm:$0xf]
    %v85 = vld [vmem:[%s76 + $0x20] sm:$0xf]
    %v86 = vld [vmem:[%s76 + $0x24] sm:$0xf]
    %v87 = vld [vmem:[%s76 + $0x28] sm:$0xf]
    %v88 = vld [vmem:[%s76 + $0x2c] sm:$0xf]
    %v89 = vld [vmem:[%s76 + $0x30] sm:$0xf]
    %v90 = vld [vmem:[%s76 + $0x34] sm:$0xf]
    %v91 = vld [vmem:[%s76 + $0x38] sm:$0xf]
    %v92 = vld [vmem:[%s76 + $0x3c] sm:$0xf]
    %v93 = vld [vmem:[%s5] sm:$0x1]
    %s94 = scalar_lea.vmem %s5, 1
    %v95 = vld [vmem:[%s94] sm:$0x1]
    %v96 = vld [vmem:[%s0] sm:$0xff]
    %v97 = vld [vmem:[%s0 + $0x8] sm:$0xff]
    %v99 = vperm.slane %v41, 0
    %vm101 = vcmask 64512
    %v103 = vsel %vm101, %v96, 0
    %v106 = vsel %vm101, %v97, 0
    %108 = vmatpush.msra.mxu0 0.0
    %109 = vmatpush.msra.mxu0 0.0
    %110 = vmatpush.msra.mxu0 0.0
    %111 = vmatpush.msra.mxu0 0.0
    %112 = vmatpush.msra.mxu0 0.0
    %113 = vmatpush.msra.mxu0 0.0
    %114 = vmatpush.msra.mxu0 0.0
    %115 = vmatpush.msra.mxu0 0.0
    %116 = vmatpush.msra.mxu0 0.0
    %117 = vmatpush.msra.mxu0 0.0
    %118 = vmatpush.msra.mxu0 0.0
    %119 = vmatpush.msra.mxu0 0.0
    %120 = vmatpush.msra.mxu0 0.0
    %121 = vmatpush.msra.mxu0 0.0
    %122 = vmatpush.msra.mxu0 0.0
    %123 = vmatpush.msra.mxu0 %v40
    %124 = vmatmul.f32.gmra.mxu0 %v103
    %v125 = vpop.f32.mrf.mxu0
    %v126 = vadd.f32 %v99, %v125
    %127 = vmatmul.f32.gmra.mxu0 %v106
    %v128 = vpop.f32.mrf.mxu0
    %v129 = vadd.f32 %v99, %v128
    %130 = vdwg.mxu0
    %v131 = vmul.f32 %v126, 0.01
    %v132 = vmul.f32 %v129, 0.01
    %v133 = vmax.f32 %v126, %v131
    %v134 = vmax.f32 %v129, %v132
    %v135 = vpack.c.bf16 %v134, %v133
    %v137 = vperm.slane %v43, 0
    %v155 = vunpack.c.l.b16 %v44
    %v156 = vunpack.c.l.b16 %v45
    %v157 = vunpack.c.l.b16 %v46
    %v158 = vunpack.c.l.b16 %v47
    %v159 = vunpack.c.l.b16 %v48
    %v160 = vunpack.c.l.b16 %v49
    %v161 = vunpack.c.l.b16 %v50
    %v162 = vunpack.c.l.b16 %v51
    %v163 = vunpack.c.l.b16 %v52
    %v164 = vunpack.c.l.b16 %v53
    %v165 = vunpack.c.l.b16 %v54
    %v166 = vunpack.c.l.b16 %v55
    %v167 = vunpack.c.l.b16 %v56
    %v168 = vunpack.c.l.b16 %v57
    %v169 = vunpack.c.l.b16 %v58
    %v170 = vunpack.c.l.b16 %v59
    %v171 = vpack.c.b16 %v156, %v155
    %v172 = vpack.c.b16 %v158, %v157
    %v173 = vpack.c.b16 %v160, %v159
    %v174 = vpack.c.b16 %v162, %v161
    %v175 = vpack.c.b16 %v164, %v163
    %v176 = vpack.c.b16 %v166, %v165
    %v177 = vpack.c.b16 %v168, %v167
    %v178 = vpack.c.b16 %v170, %v169
    %187 = vmatpush.bf16.msra.mxu0 %v178
    %188 = vmatpush.bf16.msra.mxu0 %v177
    %189 = vmatpush.bf16.msra.mxu0 %v176
    %190 = vmatpush.bf16.msra.mxu0 %v175
    %191 = vmatpush.bf16.msra.mxu0 %v174
    %192 = vmatpush.bf16.msra.mxu0 %v173
    %193 = vmatpush.bf16.msra.mxu0 %v172
    %194 = vmatpush.bf16.msra.mxu0 %v171
    %195 = vmatmul.bf16.gmra.mxu0 %v135
    %v196 = vpop.f32.mrf.mxu0
    %v197 = vadd.f32 %v137, %v196
    %v198 = vpop.f32.mrf.mxu0
    %v199 = vadd.f32 %v137, %v198
    %200 = vdwg.mxu0
    %s201 = scalar_lea.vmem %s0, 16
    %v202 = vld [vmem:[%s201] sm:$0xff]
    %v203 = vld [vmem:[%s201 + $0x8] sm:$0xff]
    %v205 = vsel %vm101, %v202, 0
    %v208 = vsel %vm101, %v203, 0
    %210 = vmatpush.msra.mxu0 0.0
    %211 = vmatpush.msra.mxu0 0.0
    %212 = vmatpush.msra.mxu0 0.0
    %213 = vmatpush.msra.mxu0 0.0
    %214 = vmatpush.msra.mxu0 0.0
    %215 = vmatpush.msra.mxu0 0.0
    %216 = vmatpush.msra.mxu0 0.0
    %217 = vmatpush.msra.mxu0 0.0
    %218 = vmatpush.msra.mxu0 0.0
    %219 = vmatpush.msra.mxu0 0.0
    %220 = vmatpush.msra.mxu0 0.0
    %221 = vmatpush.msra.mxu0 0.0
    %222 = vmatpush.msra.mxu0 0.0
    %223 = vmatpush.msra.mxu0 0.0
    %224 = vmatpush.msra.mxu0 0.0
    %225 = vmatpush.msra.mxu0 %v40
    %226 = vmatmul.f32.gmra.mxu0 %v205
    %v227 = vpop.f32.mrf.mxu0
    %v228 = vadd.f32 %v99, %v227
    %229 = vmatmul.f32.gmra.mxu0 %v208
    %v230 = vpop.f32.mrf.mxu0
    %v231 = vadd.f32 %v99, %v230
    %232 = vdwg.mxu0
    %v233 = vmul.f32 %v228, 0.01
    %v234 = vmul.f32 %v231, 0.01
    %v235 = vmax.f32 %v228, %v233
    %v236 = vmax.f32 %v231, %v234
    %v237 = vpack.c.bf16 %v236, %v235
    %238 = vmatpush.bf16.msra.mxu0 %v178
    %239 = vmatpush.bf16.msra.mxu0 %v177
    %240 = vmatpush.bf16.msra.mxu0 %v176
    %241 = vmatpush.bf16.msra.mxu0 %v175
    %242 = vmatpush.bf16.msra.mxu0 %v174
    %243 = vmatpush.bf16.msra.mxu0 %v173
    %244 = vmatpush.bf16.msra.mxu0 %v172
    %245 = vmatpush.bf16.msra.mxu0 %v171
    %246 = vmatmul.bf16.gmra.mxu0 %v237
    %v247 = vpop.f32.mrf.mxu0
    %v248 = vadd.f32 %v137, %v247
    %v249 = vpop.f32.mrf.mxu0
    %v250 = vadd.f32 %v137, %v249
    %251 = vdwg.mxu0
    %v252 = vadd.f32 %v197, %v248
    %v253 = vadd.f32 %v199, %v250
    %s254 = scalar_lea.vmem %s0, 32
    %v255 = vld [vmem:[%s254] sm:$0xff]
    %v256 = vld [vmem:[%s254 + $0x8] sm:$0xff]
    %v258 = vsel %vm101, %v255, 0
    %v261 = vsel %vm101, %v256, 0
    %263 = vmatpush.msra.mxu0 0.0
    %264 = vmatpush.msra.mxu0 0.0
    %265 = vmatpush.msra.mxu0 0.0
    %266 = vmatpush.msra.mxu0 0.0
    %267 = vmatpush.msra.mxu0 0.0
    %268 = vmatpush.msra.mxu0 0.0
    %269 = vmatpush.msra.mxu0 0.0
    %270 = vmatpush.msra.mxu0 0.0
    %271 = vmatpush.msra.mxu0 0.0
    %272 = vmatpush.msra.mxu0 0.0
    %273 = vmatpush.msra.mxu0 0.0
    %274 = vmatpush.msra.mxu0 0.0
    %275 = vmatpush.msra.mxu0 0.0
    %276 = vmatpush.msra.mxu0 0.0
    %277 = vmatpush.msra.mxu0 0.0
    %278 = vmatpush.msra.mxu0 %v40
    %279 = vmatmul.f32.gmra.mxu0 %v258
    %v280 = vpop.f32.mrf.mxu0
    %v281 = vadd.f32 %v99, %v280
    %282 = vmatmul.f32.gmra.mxu0 %v261
    %v283 = vpop.f32.mrf.mxu0
    %v284 = vadd.f32 %v99, %v283
    %285 = vdwg.mxu0
    %v286 = vmul.f32 %v281, 0.01
    %v287 = vmul.f32 %v284, 0.01
    %v288 = vmax.f32 %v281, %v286
    %v289 = vmax.f32 %v284, %v287
    %v290 = vpack.c.bf16 %v289, %v288
    %291 = vmatpush.bf16.msra.mxu0 %v178
    %292 = vmatpush.bf16.msra.mxu0 %v177
    %293 = vmatpush.bf16.msra.mxu0 %v176
    %294 = vmatpush.bf16.msra.mxu0 %v175
    %295 = vmatpush.bf16.msra.mxu0 %v174
    %296 = vmatpush.bf16.msra.mxu0 %v173
    %297 = vmatpush.bf16.msra.mxu0 %v172
    %298 = vmatpush.bf16.msra.mxu0 %v171
    %299 = vmatmul.bf16.gmra.mxu0 %v290
    %v300 = vpop.f32.mrf.mxu0
    %v301 = vadd.f32 %v137, %v300
    %v302 = vpop.f32.mrf.mxu0
    %v303 = vadd.f32 %v137, %v302
    %304 = vdwg.mxu0
    %v305 = vadd.f32 %v252, %v301
    %v306 = vadd.f32 %v253, %v303
    %s307 = scalar_lea.vmem %s0, 48
    %v308 = vld [vmem:[%s307] sm:$0xff]
    %v309 = vld [vmem:[%s307 + $0x8] sm:$0xff]
    %v311 = vsel %vm101, %v308, 0
    %v314 = vsel %vm101, %v309, 0
    %316 = vmatpush.msra.mxu0 0.0
    %317 = vmatpush.msra.mxu0 0.0
    %318 = vmatpush.msra.mxu0 0.0
    %319 = vmatpush.msra.mxu0 0.0
    %320 = vmatpush.msra.mxu0 0.0
    %321 = vmatpush.msra.mxu0 0.0
    %322 = vmatpush.msra.mxu0 0.0
    %323 = vmatpush.msra.mxu0 0.0
    %324 = vmatpush.msra.mxu0 0.0
    %325 = vmatpush.msra.mxu0 0.0
    %326 = vmatpush.msra.mxu0 0.0
    %327 = vmatpush.msra.mxu0 0.0
    %328 = vmatpush.msra.mxu0 0.0
    %329 = vmatpush.msra.mxu0 0.0
    %330 = vmatpush.msra.mxu0 0.0
    %331 = vmatpush.msra.mxu0 %v40
    %332 = vmatmul.f32.gmra.mxu0 %v311
    %v333 = vpop.f32.mrf.mxu0
    %v334 = vadd.f32 %v99, %v333
    %335 = vmatmul.f32.gmra.mxu0 %v314
    %v336 = vpop.f32.mrf.mxu0
    %v337 = vadd.f32 %v99, %v336
    %338 = vdwg.mxu0
    %v339 = vmul.f32 %v334, 0.01
    %v340 = vmul.f32 %v337, 0.01
    %v341 = vmax.f32 %v334, %v339
    %v342 = vmax.f32 %v337, %v340
    %v343 = vpack.c.bf16 %v342, %v341
    %344 = vmatpush.bf16.msra.mxu0 %v178
    %345 = vmatpush.bf16.msra.mxu0 %v177
    %346 = vmatpush.bf16.msra.mxu0 %v176
    %347 = vmatpush.bf16.msra.mxu0 %v175
    %348 = vmatpush.bf16.msra.mxu0 %v174
    %349 = vmatpush.bf16.msra.mxu0 %v173
    %350 = vmatpush.bf16.msra.mxu0 %v172
    %351 = vmatpush.bf16.msra.mxu0 %v171
    %352 = vmatmul.bf16.gmra.mxu0 %v343
    %v353 = vpop.f32.mrf.mxu0
    %v354 = vadd.f32 %v137, %v353
    %v355 = vpop.f32.mrf.mxu0
    %v356 = vadd.f32 %v137, %v355
    %357 = vdwg.mxu0
    %v358 = vadd.f32 %v305, %v354
    %v359 = vadd.f32 %v306, %v356
    %v360 = vpack.c.bf16 %v359, %v358
    %v362 = vperm.slane %v93, 0
    %v380 = vunpack.c.l.b16 %v60
    %v381 = vunpack.c.l.b16 %v61
    %v382 = vunpack.c.l.b16 %v62
    %v383 = vunpack.c.l.b16 %v63
    %v384 = vunpack.c.l.b16 %v64
    %v385 = vunpack.c.l.b16 %v65
    %v386 = vunpack.c.l.b16 %v66
    %v387 = vunpack.c.l.b16 %v67
    %v388 = vunpack.c.l.b16 %v68
    %v389 = vunpack.c.l.b16 %v69
    %v390 = vunpack.c.l.b16 %v70
    %v391 = vunpack.c.l.b16 %v71
    %v392 = vunpack.c.l.b16 %v72
    %v393 = vunpack.c.l.b16 %v73
    %v394 = vunpack.c.l.b16 %v74
    %v395 = vunpack.c.l.b16 %v75
    %v396 = vpack.c.b16 %v381, %v380
    %v397 = vpack.c.b16 %v383, %v382
    %v398 = vpack.c.b16 %v385, %v384
    %v399 = vpack.c.b16 %v387, %v386
    %v400 = vpack.c.b16 %v389, %v388
    %v401 = vpack.c.b16 %v391, %v390
    %v402 = vpack.c.b16 %v393, %v392
    %v403 = vpack.c.b16 %v395, %v394
    %412 = vmatpush.bf16.msra.mxu0 %v403
    %413 = vmatpush.bf16.msra.mxu0 %v402
    %414 = vmatpush.bf16.msra.mxu0 %v401
    %415 = vmatpush.bf16.msra.mxu0 %v400
    %416 = vmatpush.bf16.msra.mxu0 %v399
    %417 = vmatpush.bf16.msra.mxu0 %v398
    %418 = vmatpush.bf16.msra.mxu0 %v397
    %419 = vmatpush.bf16.msra.mxu0 %v396
    %420 = vmatmul.bf16.gmra.mxu0 %v360
    %v421 = vpop.f32.mrf.mxu0
    %v422 = vadd.f32 %v362, %v421
    %v423 = vpop.f32.mrf.mxu0
    %v424 = vadd.f32 %v362, %v423
    %425 = vdwg.mxu0
    %v426 = vmul.f32 %v422, 0.01
    %v427 = vmul.f32 %v424, 0.01
    %v428 = vmax.f32 %v422, %v426
    %v429 = vmax.f32 %v424, %v427
    %v430 = vpack.c.bf16 %v429, %v428
    %v432 = vperm.slane %v95, 0
    %v450 = vunpack.c.l.b16 %v77
    %v451 = vunpack.c.l.b16 %v78
    %v452 = vunpack.c.l.b16 %v79
    %v453 = vunpack.c.l.b16 %v80
    %v454 = vunpack.c.l.b16 %v81
    %v455 = vunpack.c.l.b16 %v82
    %v456 = vunpack.c.l.b16 %v83
    %v457 = vunpack.c.l.b16 %v84
    %v458 = vunpack.c.l.b16 %v85
    %v459 = vunpack.c.l.b16 %v86
    %v460 = vunpack.c.l.b16 %v87
    %v461 = vunpack.c.l.b16 %v88
    %v462 = vunpack.c.l.b16 %v89
    %v463 = vunpack.c.l.b16 %v90
    %v464 = vunpack.c.l.b16 %v91
    %v465 = vunpack.c.l.b16 %v92
    %v466 = vpack.c.b16 %v451, %v450
    %v467 = vpack.c.b16 %v453, %v452
    %v468 = vpack.c.b16 %v455, %v454
    %v469 = vpack.c.b16 %v457, %v456
    %v470 = vpack.c.b16 %v459, %v458
    %v471 = vpack.c.b16 %v461, %v460
    %v472 = vpack.c.b16 %v463, %v462
    %v473 = vpack.c.b16 %v465, %v464
    %482 = vmatpush.bf16.msra.mxu0 %v473
    %483 = vmatpush.bf16.msra.mxu0 %v472
    %484 = vmatpush.bf16.msra.mxu0 %v471
    %485 = vmatpush.bf16.msra.mxu0 %v470
    %486 = vmatpush.bf16.msra.mxu0 %v469
    %487 = vmatpush.bf16.msra.mxu0 %v468
    %488 = vmatpush.bf16.msra.mxu0 %v467
    %489 = vmatpush.bf16.msra.mxu0 %v466
    %490 = vmatmul.bf16.gmra.mxu0 %v430
    %v491 = vpop.f32.mrf.mxu0
    %v492 = vadd.f32 %v432, %v491
    %v493 = vpop.f32.mrf.mxu0
    %v494 = vadd.f32 %v432, %v493
    %495 = vdwg.mxu0
    %496 = vst [vmem:[#allocation5] sm:$0xff] %v492
    %497 = vst [vmem:[#allocation5 + $0x8] sm:$0xff] %v494
    // Predicated region
    $region30: #{tpu_custom_call.1} parent=1 // pred_check
      _
    $region31: #{tpu_custom_call.1} parent=1 // pred_check_branch
      %499 = sbr.rel (0) target = $region33
    $region32: #{tpu_custom_call.1} parent=1 // pred_region
      %501 = vsyncadd [#allocation4], 0
      %s502 = sshll.u32 [#allocation5], 4
      %s503 = int_to_ptr.vmem [resolvable:$true] %s502
      %s504 = sshll.u32 %s6, 4
      %s505 = int_to_ptr.hbm [resolvable:$true] %s504
      %510 = dma.vmem_to_hbm [thread:$0]  %s503, 256, %s505, [#allocation4], 128, 128, 8
    $region33: #{tpu_custom_call.1} parent=1 // pred_fallthru
      _
    // Predicated region
    $region34: #{tpu_custom_call.1} parent=1 // pred_check
      _
    $region35: #{tpu_custom_call.1} parent=1 // pred_check_branch
      %512 = sbr.rel (0) target = $region37
    $region36: #{tpu_custom_call.1} parent=1 // pred_region
      %514 = dma.done [#allocation4], 256
    $region37: #{tpu_custom_call.1} parent=1 // pred_fallthru
      _
    %515 = vsyncpa [#allocation3], 1
    %516 = vsyncpa [#allocation4], 1

</llo_original>
